<compile_context>
chip_gen: v7x
topology: tpu7x:2x2x1
jax: 0.10.0
libtpu: 0.0.40
codegen_flags: <defaults>
</compile_context>

<pallas_src>
import functools

import jax
import jax.numpy as jnp
from jax.experimental import pallas as pl
from jax.experimental.pallas import tpu as pltpu

input_dim = 5
hidden_dim1 = 4
hidden_dim2 = 4
output_dim = 3
batch_size = 10

# Feature dims (3..5) padded to the f32 sublane granularity.
FEAT_PAD = 8
P = FEAT_PAD  # all of input_dim / hidden_dim1 / hidden_dim2 / output_dim fit in 8
SLAB_COLS = 128           # 3*P weight cols + 3 bias cols = 27 -> one 4 KiB vreg tile
_NEG = -1.0e30            # softmax mask value for padded output rows

# Batch tile (lanes).  The kernel moves ~(8+8)*4 = 64 B of VMEM traffic per
# batch row; a 64K tile keeps per-grid-step overhead (~0.35 us) negligible
# while staying well under the 32 MiB scoped VMEM budget (v5e/v6e/v7x).
DEFAULT_TILE_B = 65536
VMEM_LIMIT_BYTES = 32 * 1024 * 1024


def _round_up(n, m):
    return ((n + m - 1) // m) * m


def mlp_kernel(p_ref, x_ref, o_ref):
    # Static slices of the (8, 128) parameter slab (zero-cost ref views).
    w1 = p_ref[:, 0 * P:1 * P]          # [P, P]  (fc1 weight, zero-padded)
    w2 = p_ref[:, 1 * P:2 * P]          # [P, P]
    w3 = p_ref[:, 2 * P:3 * P]          # [P, P]
    b1 = p_ref[:, 3 * P + 0:3 * P + 1]  # [P, 1]
    b2 = p_ref[:, 3 * P + 1:3 * P + 2]  # [P, 1]
    b3 = p_ref[:, 3 * P + 2:3 * P + 3]  # [P, 1] (padded rows hold -1e30)

    x = x_ref[...]                      # [P, TILE_B]  (features x batch-lanes)

    # W[out,in] @ X[in,B]: contract weight axis 1 with x axis 0 -- no implicit
    # RHS transpose in the hot loop.
    h1 = jnp.tanh(jnp.dot(w1, x, preferred_element_type=jnp.float32) + b1)
    h2 = jnp.tanh(jnp.dot(w2, h1, preferred_element_type=jnp.float32) + b2)
    y = jnp.dot(w3, h2, preferred_element_type=jnp.float32) + b3

    # Numerically stable softmax over the feature (sublane) axis.  Padded rows
    # carry -1e30 from the packed bias, so exp(.) == 0 and they never pollute
    # the denominator.  Exact division (memory/step-overhead bound kernel).
    m = jnp.max(y, axis=0, keepdims=True)          # [1, TILE_B]
    e = jnp.exp(y - m)                              # [P, TILE_B]
    o_ref[...] = (e / jnp.sum(e, axis=0, keepdims=True)).astype(o_ref.dtype)


def pack_params(w1, b1, w2, b2, w3, b3):
    """One-time packing of all weights/biases into a single (8, 128) f32 slab."""
    def pad_w(w):
        o, i = w.shape
        return jnp.pad(w.astype(jnp.float32), ((0, P - o), (0, P - i)))

    def pad_b(b, fill=0.0):
        return jnp.pad(b.astype(jnp.float32), (0, P - b.shape[0]),
                       constant_values=fill)

    slab = jnp.zeros((P, SLAB_COLS), jnp.float32)
    slab = slab.at[:, 0 * P:1 * P].set(pad_w(w1))
    slab = slab.at[:, 1 * P:2 * P].set(pad_w(w2))
    slab = slab.at[:, 2 * P:3 * P].set(pad_w(w3))
    slab = slab.at[:, 3 * P + 0].set(pad_b(b1))
    slab = slab.at[:, 3 * P + 1].set(pad_b(b2))
    # Padded logits get -1e30 so they vanish in the softmax.
    slab = slab.at[:, 3 * P + 2].set(pad_b(b3, fill=_NEG))
    return slab


@functools.partial(jax.jit, static_argnames=("tile_b",))
def three_layer_mlp(x, params, *, tile_b=DEFAULT_TILE_B):
    """x: [B, input_dim] float32; params: (8, 128) slab from pack_params."""
    B, d_in = x.shape

    # Tile selection: lanes come in multiples of 128; cap the tile at about
    # half the (lane-padded) batch so v7x's two TensorCores both get grid
    # steps whenever B > 128, then pad B up to the tile.
    b128 = _round_up(B, 128)
    half = _round_up(pl.cdiv(b128, 2), 128)
    tb = max(128, min(tile_b, half))
    padded_B = _round_up(B, tb)

    # One-time layout change in the wrapper: feature-major [P, padded_B].
    xt = jnp.pad(x.T, ((0, P - d_in), (0, padded_B - B)))

    out = pl.pallas_call(
        mlp_kernel,
        out_shape=jax.ShapeDtypeStruct((P, padded_B), jnp.float32),
        grid=(padded_B // tb,),
        in_specs=[
            pl.BlockSpec((P, SLAB_COLS), lambda i: (0, 0)),  # params: resident
            pl.BlockSpec((P, tb), lambda i: (0, i)),         # x: tiled over lanes
        ],
        out_specs=pl.BlockSpec((P, tb), lambda i: (0, i)),
        compiler_params=pltpu.CompilerParams(
            dimension_semantics=("parallel",),               # megacore on v7x
            vmem_limit_bytes=VMEM_LIMIT_BYTES),
    )(params, xt)

    return out[:output_dim, :B].T


def _init_linear(key, out_features, in_features):
    """Deterministic PyTorch-like uniform(-1/sqrt(in), 1/sqrt(in)) init."""
    kw, kb = jax.random.split(key)
    bound = 1.0 / jnp.sqrt(jnp.float32(in_features))
    w = jax.random.uniform(kw, (out_features, in_features), jnp.float32, -bound, bound)
    b = jax.random.uniform(kb, (out_features,), jnp.float32, -bound, bound)
    return w, b


def _reference(x, w1, b1, w2, b2, w3, b3):
    h1 = jnp.tanh(x @ w1.T + b1)
    h2 = jnp.tanh(h1 @ w2.T + b2)
    y = h2 @ w3.T + b3
    return jax.nn.softmax(y, axis=1)


if __name__ == "__main__":
    key = jax.random.PRNGKey(0)
    kx, k1, k2, k3 = jax.random.split(key, 4)

    x = jax.random.normal(kx, (batch_size, input_dim), jnp.float32)
    w1, b1 = _init_linear(k1, hidden_dim1, input_dim)
    w2, b2 = _init_linear(k2, hidden_dim2, hidden_dim1)
    w3, b3 = _init_linear(k3, output_dim, hidden_dim2)

    # Parameter packing happens once, outside the per-call hot path.
    params = pack_params(w1, b1, w2, b2, w3, b3)

    out = three_layer_mlp(x, params)
    out = jax.block_until_ready(out)

    ref = _reference(x, w1, b1, w2, b2, w3, b3)
    assert out.shape == (batch_size, output_dim)
    assert jnp.allclose(out, ref, atol=1e-5, rtol=1e-5), "mismatch vs reference"
    assert jnp.allclose(jnp.sum(out, axis=1), 1.0, atol=1e-5), "softmax rows must sum to ~1"

    # Exercise the multi-tile grid path with a larger, non-multiple-of-128 batch.
    xb = jax.random.normal(jax.random.PRNGKey(1), (2055, input_dim), jnp.float32)
    outb = jax.block_until_ready(three_layer_mlp(xb, params))
    refb = _reference(xb, w1, b1, w2, b2, w3, b3)
    assert outb.shape == (2055, output_dim)
    assert jnp.allclose(outb, refb, atol=1e-5, rtol=1e-5), "mismatch vs reference (large B)"

    print("KERNEL_OK")
</pallas_src>

<mosaic_0001>
module attributes {stable_mosaic.version = 11 : i64} {
  func.func @mlp_kernel(%arg0: i32, %arg1: memref<8x128xf32, #tpu.memory_space<vmem>>, %arg2: memref<8x128xf32, #tpu.memory_space<vmem>>, %arg3: memref<8x128xf32, #tpu.memory_space<vmem>>) attributes {dimension_semantics = [#tpu.dimension_semantics<parallel>], iteration_bounds = array<i64: 1>, scalar_prefetch = 0 : i64, scratch_operands = 0 : i64, tpu.core_type = #tpu.core_type<tc>, window_params = [{pipeline_mode = #tpu.pipeline_mode<synchronous>, transform_indices = @transform_0, window_bounds = array<i64: 8, 128>}, {transform_indices = @transform_1, window_bounds = array<i64: 8, 128>}, {transform_indices = @transform_2, window_bounds = array<i64: 8, 128>}]} {
    %c0 = arith.constant 0 : index
    %c0_0 = arith.constant 0 : index
    %0 = vector.load %arg1[%c0, %c0_0] : memref<8x128xf32, #tpu.memory_space<vmem>>, vector<8x8xf32>
    %c0_1 = arith.constant 0 : index
    %c8 = arith.constant 8 : index
    %1 = vector.load %arg1[%c0_1, %c8] : memref<8x128xf32, #tpu.memory_space<vmem>>, vector<8x8xf32>
    %c0_2 = arith.constant 0 : index
    %c16 = arith.constant 16 : index
    %2 = vector.load %arg1[%c0_2, %c16] : memref<8x128xf32, #tpu.memory_space<vmem>>, vector<8x8xf32>
    %c0_3 = arith.constant 0 : index
    %c24 = arith.constant 24 : index
    %3 = vector.load %arg1[%c0_3, %c24] : memref<8x128xf32, #tpu.memory_space<vmem>>, vector<8x1xf32>
    %c0_4 = arith.constant 0 : index
    %c25 = arith.constant 25 : index
    %4 = vector.load %arg1[%c0_4, %c25] : memref<8x128xf32, #tpu.memory_space<vmem>>, vector<8x1xf32>
    %c0_5 = arith.constant 0 : index
    %c26 = arith.constant 26 : index
    %5 = vector.load %arg1[%c0_5, %c26] : memref<8x128xf32, #tpu.memory_space<vmem>>, vector<8x1xf32>
    %c0_6 = arith.constant 0 : index
    %c0_7 = arith.constant 0 : index
    %6 = vector.load %arg2[%c0_6, %c0_7] : memref<8x128xf32, #tpu.memory_space<vmem>>, vector<8x128xf32>
    %cst = arith.constant dense<0.000000e+00> : vector<8x128xf32>
    %7 = tpu.matmul %0, %6, %cst {dimension_numbers = #tpu.dot_dimension_numbers<[1], [0], [0], [1], [0, 0, 1, 1], [], []>} : vector<8x8xf32>, vector<8x128xf32>, vector<8x128xf32> -> vector<8x128xf32>
    %8 = vector.broadcast %3 : vector<8x1xf32> to vector<8x128xf32>
    %9 = arith.addf %7, %8 : vector<8x128xf32>
    %10 = math.tanh %9 : vector<8x128xf32>
    %cst_8 = arith.constant dense<0.000000e+00> : vector<8x128xf32>
    %11 = tpu.matmul %1, %10, %cst_8 {dimension_numbers = #tpu.dot_dimension_numbers<[1], [0], [0], [1], [0, 0, 1, 1], [], []>} : vector<8x8xf32>, vector<8x128xf32>, vector<8x128xf32> -> vector<8x128xf32>
    %12 = vector.broadcast %4 : vector<8x1xf32> to vector<8x128xf32>
    %13 = arith.addf %11, %12 : vector<8x128xf32>
    %14 = math.tanh %13 : vector<8x128xf32>
    %cst_9 = arith.constant dense<0.000000e+00> : vector<8x128xf32>
    %15 = tpu.matmul %2, %14, %cst_9 {dimension_numbers = #tpu.dot_dimension_numbers<[1], [0], [0], [1], [0, 0, 1, 1], [], []>} : vector<8x8xf32>, vector<8x128xf32>, vector<8x128xf32> -> vector<8x128xf32>
    %16 = vector.broadcast %5 : vector<8x1xf32> to vector<8x128xf32>
    %17 = arith.addf %15, %16 : vector<8x128xf32>
    %cst_10 = arith.constant dense<0xFF800000> : vector<128xf32>
    %18 = vector.multi_reduction <maximumf>, %17, %cst_10 [0] : vector<8x128xf32> to vector<128xf32>
    %19 = vector.shape_cast %18 : vector<128xf32> to vector<1x128xf32>
    %20 = vector.broadcast %19 : vector<1x128xf32> to vector<8x128xf32>
    %21 = arith.subf %17, %20 : vector<8x128xf32>
    %22 = math.exp %21 : vector<8x128xf32>
    %cst_11 = arith.constant dense<0.000000e+00> : vector<128xf32>
    %23 = vector.multi_reduction <add>, %22, %cst_11 [0] : vector<8x128xf32> to vector<128xf32>
    %24 = vector.shape_cast %23 : vector<128xf32> to vector<1x128xf32>
    %25 = vector.broadcast %24 : vector<1x128xf32> to vector<8x128xf32>
    %26 = arith.divf %22, %25 : vector<8x128xf32>
    %c0_12 = arith.constant 0 : index
    %c0_13 = arith.constant 0 : index
    %27 = vector.load %arg3[%c0_12, %c0_13] : memref<8x128xf32, #tpu.memory_space<vmem>>, vector<8x128xf32>
    tpu.vector_store %arg3[%c0_12, %c0_13], %26 {strides = array<i32>} : memref<8x128xf32, #tpu.memory_space<vmem>>, vector<8x128xf32>,
    return
  }
  func.func @transform_0(%arg0: i32) -> (i32, i32) {
    %c0_i32 = arith.constant 0 : i32
    %c0_i32_0 = arith.constant 0 : i32
    %c0_i32_1 = arith.constant 0 : i32
    return %c0_i32, %c0_i32_0 : i32, i32
  }
  func.func @transform_1(%arg0: i32) -> (i32, i32) {
    %c0_i32 = arith.constant 0 : i32
    %c0_i32_0 = arith.constant 0 : i32
    return %c0_i32, %arg0 : i32, i32
  }
  func.func @transform_2(%arg0: i32) -> (i32, i32) {
    %c0_i32 = arith.constant 0 : i32
    %c0_i32_0 = arith.constant 0 : i32
    return %c0_i32, %arg0 : i32, i32
  }
}

</mosaic_0001>

<llo_original>
// kernel: three_layer_mlp.1
$region0: #{three_layer_mlp.1}
  #allocation0 [shape = 'u32[]', space=smem, size = 0x4, offset = 0x4, fixed_abs, tag = 'smem constant byte address 0x4 - core index']
  #allocation1 [shape = 'u32[144,128]{1,0:T(1,128)}', space=vmem, size = 0x12000, scoped, tag = 'internal scratch']
  %s0 = inlined_call_operand.vmem [shape: f32[8,128], index: 0, kind: input, shape index: {}]
  %s1 = inlined_call_operand.vmem [shape: f32[8,128], index: 1, kind: input, shape index: {}]
  %s2 = inlined_call_operand.vmem [shape: f32[8,128], index: 2, kind: output, shape index: {}]
  %s3 = sld [smem:[#allocation0]]
  $region18: #{three_layer_mlp.1} parent=0
    _
  %s5 = ssub.s32 1, %s3
  %s6 = scalar_select 0, %s5, %s3
  // Predicated region
  $region2: #{three_layer_mlp.1} parent=0 // pred_check
    _
  $region3: #{three_layer_mlp.1} parent=0 // pred_check_branch
    %8 = sbr.rel (0) target = $region5
  $region4: #{three_layer_mlp.1} parent=0 // pred_region
    _
  $region5: #{three_layer_mlp.1} parent=0 // pred_fallthru
    _
  // Predicated region
  $region6: #{three_layer_mlp.1} parent=0 // pred_check
    _
  $region7: #{three_layer_mlp.1} parent=0 // pred_check_branch
    %10 = sbr.rel (0) target = $region9
  $region8: #{three_layer_mlp.1} parent=0 // pred_region
    _
  $region9: #{three_layer_mlp.1} parent=0 // pred_fallthru
    _
  %v11 = vld [vmem:[%s0] sm:$0xff]
  %v12 = vld [vmem:[%s1] sm:$0xff]
  %14 = vset.pattern.permute.xlu0 24
  %15 = vperm.xlu0 %14, %v11
  %v16 = vpop.permute.xlu0 %15
  %vm18 = vcmask 64512
  %v19 = vsel %vm18, %v11, 0
  %21 = vmatprep.subr.mxu0 0.0
  %22 = vmatpush1.msra.mxu0 %v12
  %23 = vmatprep.subr.mxu0 0.0
  %24 = vmatpush1.msra.mxu0 0.0
  %25 = vmatprep.subr.mxu0 0.0
  %26 = vmatpush1.msra.mxu0 0.0
  %27 = vmatprep.subr.mxu0 0.0
  %28 = vmatpush1.msra.mxu0 0.0
  %29 = vmatprep.subr.mxu0 0.0
  %30 = vmatpush1.msra.mxu0 0.0
  %31 = vmatprep.subr.mxu0 0.0
  %32 = vmatpush1.msra.mxu0 0.0
  %33 = vmatprep.subr.mxu0 0.0
  %34 = vmatpush1.msra.mxu0 0.0
  %35 = vmatprep.subr.mxu0 0.0
  %36 = vmatpush1.msra.mxu0 0.0
  %37 = vmatprep.subr.mxu0 0.0
  %38 = vmatpush1.msra.mxu0 0.0
  %39 = vmatprep.subr.mxu0 0.0
  %40 = vmatpush1.msra.mxu0 0.0
  %41 = vmatprep.subr.mxu0 0.0
  %42 = vmatpush1.msra.mxu0 0.0
  %43 = vmatprep.subr.mxu0 0.0
  %44 = vmatpush1.msra.mxu0 0.0
  %45 = vmatprep.subr.mxu0 0.0
  %46 = vmatpush1.msra.mxu0 0.0
  %47 = vmatprep.subr.mxu0 0.0
  %48 = vmatpush1.msra.mxu0 0.0
  %49 = vmatprep.subr.mxu0 0.0
  %50 = vmatpush1.msra.mxu0 0.0
  %51 = vmatprep.subr.mxu0 0.0
  %52 = vmatpush1.msra.mxu0 0.0
  %53 = vmatprep.subr.mxu0 0.0
  %54 = vmatpush1.msra.mxu0 0.0
  %55 = vmatprep.subr.mxu0 0.0
  %56 = vmatpush1.msra.mxu0 0.0
  %57 = vmatprep.subr.mxu0 0.0
  %58 = vmatpush1.msra.mxu0 0.0
  %59 = vmatprep.subr.mxu0 0.0
  %60 = vmatpush1.msra.mxu0 0.0
  %61 = vmatprep.subr.mxu0 0.0
  %62 = vmatpush1.msra.mxu0 0.0
  %63 = vmatprep.subr.mxu0 0.0
  %64 = vmatpush1.msra.mxu0 0.0
  %65 = vmatprep.subr.mxu0 0.0
  %66 = vmatpush1.msra.mxu0 0.0
  %67 = vmatprep.subr.mxu0 0.0
  %68 = vmatpush1.msra.mxu0 0.0
  %69 = vmatprep.subr.mxu0 0.0
  %70 = vmatpush1.msra.mxu0 0.0
  %71 = vmatprep.subr.mxu0 0.0
  %72 = vmatpush1.msra.mxu0 0.0
  %73 = vmatprep.subr.mxu0 0.0
  %74 = vmatpush1.msra.mxu0 0.0
  %75 = vmatprep.subr.mxu0 0.0
  %76 = vmatpush1.msra.mxu0 0.0
  %77 = vmatprep.subr.mxu0 0.0
  %78 = vmatpush1.msra.mxu0 0.0
  %79 = vmatprep.subr.mxu0 0.0
  %80 = vmatpush1.msra.mxu0 0.0
  %81 = vmatprep.subr.mxu0 0.0
  %82 = vmatpush1.msra.mxu0 0.0
  %83 = vmatprep.subr.mxu0 0.0
  %84 = vmatpush1.msra.mxu0 0.0
  %85 = vmatprep.mubr.f32.mxu0 0.0
  %86 = vmatmul.mubr.f32.gmra.mrb[0].mxu0 %v19
  %v87 = vpop.f32.mrb[0].mxu0
  %v88 = vadd.f32 %v16, %v87
  %v89 = vpop.f32.mrb[0].mxu0
  %90 = vdwg.mxu0
  %v91 = vtanh.pop %v88
  %92 = vset.pattern.permute.xlu0 25
  %93 = vperm.xlu0 %92, %v11
  %v94 = vpop.permute.xlu0 %93
  %96 = vrot.lane.b32.xlu0 %v11, 120
  %v97 = vpop.permute.xlu0 %96
  %v98 = vsel %vm18, %v97, 0
  %100 = vmatprep.subr.mxu0 0.0
  %101 = vmatpush1.msra.mxu0 %v91
  %102 = vmatprep.subr.mxu0 0.0
  %103 = vmatpush1.msra.mxu0 0.0
  %104 = vmatprep.subr.mxu0 0.0
  %105 = vmatpush1.msra.mxu0 0.0
  %106 = vmatprep.subr.mxu0 0.0
  %107 = vmatpush1.msra.mxu0 0.0
  %108 = vmatprep.subr.mxu0 0.0
  %109 = vmatpush1.msra.mxu0 0.0
  %110 = vmatprep.subr.mxu0 0.0
  %111 = vmatpush1.msra.mxu0 0.0
  %112 = vmatprep.subr.mxu0 0.0
  %113 = vmatpush1.msra.mxu0 0.0
  %114 = vmatprep.subr.mxu0 0.0
  %115 = vmatpush1.msra.mxu0 0.0
  %116 = vmatprep.subr.mxu0 0.0
  %117 = vmatpush1.msra.mxu0 0.0
  %118 = vmatprep.subr.mxu0 0.0
  %119 = vmatpush1.msra.mxu0 0.0
  %120 = vmatprep.subr.mxu0 0.0
  %121 = vmatpush1.msra.mxu0 0.0
  %122 = vmatprep.subr.mxu0 0.0
  %123 = vmatpush1.msra.mxu0 0.0
  %124 = vmatprep.subr.mxu0 0.0
  %125 = vmatpush1.msra.mxu0 0.0
  %126 = vmatprep.subr.mxu0 0.0
  %127 = vmatpush1.msra.mxu0 0.0
  %128 = vmatprep.subr.mxu0 0.0
  %129 = vmatpush1.msra.mxu0 0.0
  %130 = vmatprep.subr.mxu0 0.0
  %131 = vmatpush1.msra.mxu0 0.0
  %132 = vmatprep.subr.mxu0 0.0
  %133 = vmatpush1.msra.mxu0 0.0
  %134 = vmatprep.subr.mxu0 0.0
  %135 = vmatpush1.msra.mxu0 0.0
  %136 = vmatprep.subr.mxu0 0.0
  %137 = vmatpush1.msra.mxu0 0.0
  %138 = vmatprep.subr.mxu0 0.0
  %139 = vmatpush1.msra.mxu0 0.0
  %140 = vmatprep.subr.mxu0 0.0
  %141 = vmatpush1.msra.mxu0 0.0
  %142 = vmatprep.subr.mxu0 0.0
  %143 = vmatpush1.msra.mxu0 0.0
  %144 = vmatprep.subr.mxu0 0.0
  %145 = vmatpush1.msra.mxu0 0.0
  %146 = vmatprep.subr.mxu0 0.0
  %147 = vmatpush1.msra.mxu0 0.0
  %148 = vmatprep.subr.mxu0 0.0
  %149 = vmatpush1.msra.mxu0 0.0
  %150 = vmatprep.subr.mxu0 0.0
  %151 = vmatpush1.msra.mxu0 0.0
  %152 = vmatprep.subr.mxu0 0.0
  %153 = vmatpush1.msra.mxu0 0.0
  %154 = vmatprep.subr.mxu0 0.0
  %155 = vmatpush1.msra.mxu0 0.0
  %156 = vmatprep.subr.mxu0 0.0
  %157 = vmatpush1.msra.mxu0 0.0
  %158 = vmatprep.subr.mxu0 0.0
  %159 = vmatpush1.msra.mxu0 0.0
  %160 = vmatprep.subr.mxu0 0.0
  %161 = vmatpush1.msra.mxu0 0.0
  %162 = vmatprep.subr.mxu0 0.0
  %163 = vmatpush1.msra.mxu0 0.0
  %164 = vmatprep.mubr.f32.mxu0 0.0
  %165 = vmatmul.mubr.f32.gmra.mrb[0].mxu0 %v98
  %v166 = vpop.f32.mrb[0].mxu0
  %v167 = vadd.f32 %v94, %v166
  %v168 = vpop.f32.mrb[0].mxu0
  %169 = vdwg.mxu0
  %v170 = vtanh.pop %v167
  %171 = vset.pattern.permute.xlu0 26
  %172 = vperm.xlu0 %171, %v11
  %v173 = vpop.permute.xlu0 %172
  %175 = vrot.lane.b32.xlu0 %v11, 112
  %v176 = vpop.permute.xlu0 %175
  %v177 = vsel %vm18, %v176, 0
  %179 = vmatprep.subr.mxu0 0.0
  %180 = vmatpush1.msra.mxu0 %v170
  %181 = vmatprep.subr.mxu0 0.0
  %182 = vmatpush1.msra.mxu0 0.0
  %183 = vmatprep.subr.mxu0 0.0
  %184 = vmatpush1.msra.mxu0 0.0
  %185 = vmatprep.subr.mxu0 0.0
  %186 = vmatpush1.msra.mxu0 0.0
  %187 = vmatprep.subr.mxu0 0.0
  %188 = vmatpush1.msra.mxu0 0.0
  %189 = vmatprep.subr.mxu0 0.0
  %190 = vmatpush1.msra.mxu0 0.0
  %191 = vmatprep.subr.mxu0 0.0
  %192 = vmatpush1.msra.mxu0 0.0
  %193 = vmatprep.subr.mxu0 0.0
  %194 = vmatpush1.msra.mxu0 0.0
  %195 = vmatprep.subr.mxu0 0.0
  %196 = vmatpush1.msra.mxu0 0.0
  %197 = vmatprep.subr.mxu0 0.0
  %198 = vmatpush1.msra.mxu0 0.0
  %199 = vmatprep.subr.mxu0 0.0
  %200 = vmatpush1.msra.mxu0 0.0
  %201 = vmatprep.subr.mxu0 0.0
  %202 = vmatpush1.msra.mxu0 0.0
  %203 = vmatprep.subr.mxu0 0.0
  %204 = vmatpush1.msra.mxu0 0.0
  %205 = vmatprep.subr.mxu0 0.0
  %206 = vmatpush1.msra.mxu0 0.0
  %207 = vmatprep.subr.mxu0 0.0
  %208 = vmatpush1.msra.mxu0 0.0
  %209 = vmatprep.subr.mxu0 0.0
  %210 = vmatpush1.msra.mxu0 0.0
  %211 = vmatprep.subr.mxu0 0.0
  %212 = vmatpush1.msra.mxu0 0.0
  %213 = vmatprep.subr.mxu0 0.0
  %214 = vmatpush1.msra.mxu0 0.0
  %215 = vmatprep.subr.mxu0 0.0
  %216 = vmatpush1.msra.mxu0 0.0
  %217 = vmatprep.subr.mxu0 0.0
  %218 = vmatpush1.msra.mxu0 0.0
  %219 = vmatprep.subr.mxu0 0.0
  %220 = vmatpush1.msra.mxu0 0.0
  %221 = vmatprep.subr.mxu0 0.0
  %222 = vmatpush1.msra.mxu0 0.0
  %223 = vmatprep.subr.mxu0 0.0
  %224 = vmatpush1.msra.mxu0 0.0
  %225 = vmatprep.subr.mxu0 0.0
  %226 = vmatpush1.msra.mxu0 0.0
  %227 = vmatprep.subr.mxu0 0.0
  %228 = vmatpush1.msra.mxu0 0.0
  %229 = vmatprep.subr.mxu0 0.0
  %230 = vmatpush1.msra.mxu0 0.0
  %231 = vmatprep.subr.mxu0 0.0
  %232 = vmatpush1.msra.mxu0 0.0
  %233 = vmatprep.subr.mxu0 0.0
  %234 = vmatpush1.msra.mxu0 0.0
  %235 = vmatprep.subr.mxu0 0.0
  %236 = vmatpush1.msra.mxu0 0.0
  %237 = vmatprep.subr.mxu0 0.0
  %238 = vmatpush1.msra.mxu0 0.0
  %239 = vmatprep.subr.mxu0 0.0
  %240 = vmatpush1.msra.mxu0 0.0
  %241 = vmatprep.subr.mxu0 0.0
  %242 = vmatpush1.msra.mxu0 0.0
  %243 = vmatprep.mubr.f32.mxu0 0.0
  %244 = vmatmul.mubr.f32.gmra.mrb[0].mxu0 %v177
  %v245 = vpop.f32.mrb[0].mxu0
  %v246 = vadd.f32 %v173, %v245
  %v247 = vpop.f32.mrb[0].mxu0
  %248 = vdwg.mxu0
  %v249 = vrot.slane %v246, 4
  %v250 = vmax.f32 %v246, %v249
  %v251 = vrot.slane %v250, 2
  %v252 = vmax.f32 %v250, %v251
  %v253 = vrot.slane %v252, 1
  %v254 = vmax.f32 %v252, %v253
  %v255 = vsub.f32 %v246, %v254
  %v256 = vmul.f32 %v255, 1.442695
  %v257 = vpow.pop %v256
  %v258 = vrot.slane %v257, 4
  %v259 = vadd.f32 %v257, %v258
  %v260 = vrot.slane %v259, 2
  %v261 = vadd.f32 %v259, %v260
  %v262 = vrot.slane %v261, 1
  %v263 = vadd.f32 %v261, %v262
  %v264 = vrcp.pop %v263
  %v265 = vmul.f32 %v257, %v264
  %266 = vst [vmem:[%s2] sm:$0xff] %v265
  // Predicated region
  $region10: #{three_layer_mlp.1} parent=0 // pred_check
    _
  $region11: #{three_layer_mlp.1} parent=0 // pred_check_branch
    %268 = sbr.rel (0) target = $region13
  $region12: #{three_layer_mlp.1} parent=0 // pred_region
    _
  $region13: #{three_layer_mlp.1} parent=0 // pred_fallthru
    _
  // Predicated region
  $region14: #{three_layer_mlp.1} parent=0 // pred_check
    _
  $region15: #{three_layer_mlp.1} parent=0 // pred_check_branch
    %270 = sbr.rel (0) target = $region17
  $region16: #{three_layer_mlp.1} parent=0 // pred_region
    _
  $region17: #{three_layer_mlp.1} parent=0 // pred_fallthru
    _

</llo_original>
